<compile_context>
chip_gen: v7x
topology: tpu7x:2x2x1
jax: 0.10.0
libtpu: 0.0.40
codegen_flags: <defaults>
</compile_context>

<pallas_src>
import jax
import jax.numpy as jnp
from jax.experimental import pallas as pl
from jax.experimental.pallas import tpu as pltpu


def bert_self_output_kernel(x_ref, w_ref, b_ref, res_ref, gamma_ref, beta_ref,
                            o_ref):
    # Dense: y = x @ W^T + b.  w_ref already holds W^T ([in, out]) so this is a
    # plain (1, 0) contraction -> no in-kernel layout shuffle of the resident
    # weight.  f32 accumulation on the MXU via preferred_element_type.
    y = jnp.dot(x_ref[...], w_ref[...], preferred_element_type=jnp.float32)
    y = y + b_ref[...].astype(jnp.float32)

    # Dropout is identity in eval mode.
    # TODO(synk): training-mode dropout (pltpu.prng_random_bits mask) not emitted.

    # Residual add + LayerNorm over the hidden (last) dim, all in f32.
    z = y + res_ref[...].astype(jnp.float32)
    inv_h = 1.0 / z.shape[-1]
    mean = jnp.sum(z, axis=-1, keepdims=True) * inv_h
    mean_sq = jnp.sum(z * z, axis=-1, keepdims=True) * inv_h
    var = mean_sq - mean * mean          # single-sweep E[z^2] - mean^2 (f32)
    inv = jax.lax.rsqrt(var + 1e-5)      # torch.nn.LayerNorm default eps
    # Single lane-dense write of the final result per row tile.
    o_ref[...] = ((z - mean) * inv * gamma_ref[...].astype(jnp.float32)
                  + beta_ref[...].astype(jnp.float32)).astype(o_ref.dtype)


def _round_up(x, m):
    return ((x + m - 1) // m) * m


def _choose_tm(M, H, dtype, block_rows):
    """Row-tile size: multiple of 8 sublanes, VMEM-budgeted, >=2 grid steps."""
    itemsize = jnp.dtype(dtype).itemsize
    tm = min(block_rows, _round_up(M, 8))
    tm = max(8, tm - tm % 8)

    # Conservative VMEM budget valid on every chip (v7x: 32 MiB default scoped
    # limit, 64 MiB physical): double-buffered x / res / out tiles plus ~3 f32
    # row-tile intermediates, with the single-buffered weight subtracted.
    budget = 24 * 1024 * 1024 - H * H * itemsize

    def tile_bytes(t):
        return 3 * 2 * t * H * itemsize + 3 * t * H * 4

    while tm > 8 and tile_bytes(tm) > budget:
        tm -= 8

    # Ensure >=2 grid steps so dimension_semantics=("parallel",) can actually
    # shard rows across both TensorCores on megacore parts (v7x).
    if M > 8 and pl.cdiv(M, tm) < 2:
        tm = max(8, _round_up(pl.cdiv(M, 2), 8))
    return tm


def _resident_spec(shape):
    """VMEM-resident operand: constant block index, single-buffered."""
    try:
        return pl.BlockSpec(shape, lambda i: (0, 0),
                            pipeline_mode=pl.Buffered(1))
    except TypeError:  # older BlockSpec without pipeline_mode
        return pl.BlockSpec(shape, lambda i: (0, 0))


def bert_self_output(hidden_states, input_tensor, weight, bias, gamma, beta,
                     *, block_rows=512):
    """hidden_states, input_tensor: [B, S, H]; weight: [H, H] (torch [out, in]
    layout); bias/gamma/beta: [H]."""
    B, S, H = hidden_states.shape
    M = B * S
    dtype = hidden_states.dtype

    x2d = hidden_states.reshape(M, H)
    r2d = input_tensor.reshape(M, H)

    # One-time HBM transpose (+cast) of the weight to [in, out]; amortized to
    # ~0 vs. an XLU transpose inside every grid step.
    w_t = jnp.transpose(weight).astype(dtype)
    b2d = bias.reshape(1, H)
    g2d = gamma.reshape(1, H)
    be2d = beta.reshape(1, H)

    TM = _choose_tm(M, H, dtype, block_rows)
    grid = (pl.cdiv(M, TM),)

    act_bytes = jnp.dtype(dtype).itemsize
    cost = pl.CostEstimate(
        flops=2 * M * H * H + 10 * M * H,
        bytes_accessed=(3 * M * H * act_bytes
                        + H * H * jnp.dtype(w_t.dtype).itemsize
                        + 3 * H * jnp.dtype(bias.dtype).itemsize),
        transcendentals=M,  # one rsqrt per row
    )

    out2d = pl.pallas_call(
        bert_self_output_kernel,
        out_shape=jax.ShapeDtypeStruct((M, H), dtype),
        grid_spec=pltpu.PrefetchScalarGridSpec(
            num_scalar_prefetch=0,
            grid=grid,
            in_specs=[
                pl.BlockSpec((TM, H), lambda i: (i, 0)),   # x         (row-tiled)
                _resident_spec((H, H)),                    # W^T       (resident)
                _resident_spec((1, H)),                    # bias      (resident)
                pl.BlockSpec((TM, H), lambda i: (i, 0)),   # residual  (row-tiled)
                _resident_spec((1, H)),                    # gamma     (resident)
                _resident_spec((1, H)),                    # beta      (resident)
            ],
            out_specs=pl.BlockSpec((TM, H), lambda i: (i, 0)),
        ),
        compiler_params=pltpu.CompilerParams(
            # Independent row tiles: shard across TensorCores on megacore parts.
            dimension_semantics=("parallel",)),
        cost_estimate=cost,
    )(x2d, w_t, b2d, r2d, g2d, be2d)

    return out2d.reshape(B, S, H)


if __name__ == "__main__":
    B, S, H = 2, 8, 32
    key = jax.random.PRNGKey(0)
    k1, k2, k3, k4 = jax.random.split(key, 4)

    hidden_states = jax.random.normal(k1, (B, S, H), dtype=jnp.float32)
    input_tensor = jax.random.normal(k2, (B, S, H), dtype=jnp.float32)

    # Deterministic parameter init (Linear weight/bias, LayerNorm gamma/beta).
    weight = jax.random.normal(k3, (H, H), dtype=jnp.float32) * 0.02
    bias = jax.random.normal(k4, (H,), dtype=jnp.float32) * 0.02
    gamma = jnp.ones((H,), dtype=jnp.float32)
    beta = jnp.zeros((H,), dtype=jnp.float32)

    out = bert_self_output(hidden_states, input_tensor, weight, bias, gamma,
                           beta)
    out = jax.block_until_ready(out)

    # Sanity check vs. plain-JAX reference.
    ref_y = hidden_states @ weight.T + bias
    z = ref_y + input_tensor
    mean = z.mean(-1, keepdims=True)
    var = ((z - mean) ** 2).mean(-1, keepdims=True)
    ref = (z - mean) / jnp.sqrt(var + 1e-5) * gamma + beta
    assert jnp.allclose(out, ref, atol=1e-4, rtol=1e-4)

    print("KERNEL_OK")
</pallas_src>

<mosaic_0001>
module attributes {stable_mosaic.version = 11 : i64} {
  func.func @bert_self_output_kernel(%arg0: i32, %arg1: memref<8x32xf32, #tpu.memory_space<vmem>>, %arg2: memref<32x32xf32, #tpu.memory_space<vmem>>, %arg3: memref<1x32xf32, #tpu.memory_space<vmem>>, %arg4: memref<8x32xf32, #tpu.memory_space<vmem>>, %arg5: memref<1x32xf32, #tpu.memory_space<vmem>>, %arg6: memref<1x32xf32, #tpu.memory_space<vmem>>, %arg7: memref<8x32xf32, #tpu.memory_space<vmem>>) attributes {dimension_semantics = [#tpu.dimension_semantics<parallel>], iteration_bounds = array<i64: 2>, scalar_prefetch = 0 : i64, scratch_operands = 0 : i64, tpu.core_type = #tpu.core_type<tc>, window_params = [{transform_indices = @transform_0, window_bounds = array<i64: 8, 32>}, {pipeline_mode = #tpu.pipeline_mode<synchronous>, transform_indices = @transform_1, window_bounds = array<i64: 32, 32>}, {pipeline_mode = #tpu.pipeline_mode<synchronous>, transform_indices = @transform_2, window_bounds = array<i64: 1, 32>}, {transform_indices = @transform_3, window_bounds = array<i64: 8, 32>}, {pipeline_mode = #tpu.pipeline_mode<synchronous>, transform_indices = @transform_4, window_bounds = array<i64: 1, 32>}, {pipeline_mode = #tpu.pipeline_mode<synchronous>, transform_indices = @transform_5, window_bounds = array<i64: 1, 32>}, {transform_indices = @transform_6, window_bounds = array<i64: 8, 32>}]} {
    %c0 = arith.constant 0 : index
    %c0_0 = arith.constant 0 : index
    %0 = vector.load %arg1[%c0, %c0_0] : memref<8x32xf32, #tpu.memory_space<vmem>>, vector<8x32xf32>
    %c0_1 = arith.constant 0 : index
    %c0_2 = arith.constant 0 : index
    %1 = vector.load %arg2[%c0_1, %c0_2] : memref<32x32xf32, #tpu.memory_space<vmem>>, vector<32x32xf32>
    %cst = arith.constant dense<0.000000e+00> : vector<8x32xf32>
    %2 = tpu.matmul %0, %1, %cst {dimension_numbers = #tpu.dot_dimension_numbers<[1], [0], [0], [1], [0, 0, 1, 1], [], []>} : vector<8x32xf32>, vector<32x32xf32>, vector<8x32xf32> -> vector<8x32xf32>
    %c0_3 = arith.constant 0 : index
    %c0_4 = arith.constant 0 : index
    %3 = vector.load %arg3[%c0_3, %c0_4] : memref<1x32xf32, #tpu.memory_space<vmem>>, vector<1x32xf32>
    %4 = vector.broadcast %3 : vector<1x32xf32> to vector<8x32xf32>
    %5 = arith.addf %2, %4 : vector<8x32xf32>
    %c0_5 = arith.constant 0 : index
    %c0_6 = arith.constant 0 : index
    %6 = vector.load %arg4[%c0_5, %c0_6] : memref<8x32xf32, #tpu.memory_space<vmem>>, vector<8x32xf32>
    %7 = arith.addf %5, %6 : vector<8x32xf32>
    %cst_7 = arith.constant dense<0.000000e+00> : vector<8xf32>
    %8 = vector.multi_reduction <add>, %7, %cst_7 [1] : vector<8x32xf32> to vector<8xf32>
    %9 = vector.shape_cast %8 : vector<8xf32> to vector<8x1xf32>
    %cst_8 = arith.constant 3.125000e-02 : f32
    %10 = vector.broadcast %cst_8 : f32 to vector<8x1xf32>
    %11 = arith.mulf %9, %10 : vector<8x1xf32>
    %12 = arith.mulf %7, %7 : vector<8x32xf32>
    %cst_9 = arith.constant dense<0.000000e+00> : vector<8xf32>
    %13 = vector.multi_reduction <add>, %12, %cst_9 [1] : vector<8x32xf32> to vector<8xf32>
    %14 = vector.shape_cast %13 : vector<8xf32> to vector<8x1xf32>
    %cst_10 = arith.constant 3.125000e-02 : f32
    %15 = vector.broadcast %cst_10 : f32 to vector<8x1xf32>
    %16 = arith.mulf %14, %15 : vector<8x1xf32>
    %17 = arith.mulf %11, %11 : vector<8x1xf32>
    %18 = arith.subf %16, %17 : vector<8x1xf32>
    %cst_11 = arith.constant 9.99999974E-6 : f32
    %19 = vector.broadcast %cst_11 : f32 to vector<8x1xf32>
    %20 = arith.addf %18, %19 : vector<8x1xf32>
    %21 = math.rsqrt %20 : vector<8x1xf32>
    %22 = vector.broadcast %11 : vector<8x1xf32> to vector<8x32xf32>
    %23 = arith.subf %7, %22 : vector<8x32xf32>
    %24 = vector.broadcast %21 : vector<8x1xf32> to vector<8x32xf32>
    %25 = arith.mulf %23, %24 : vector<8x32xf32>
    %c0_12 = arith.constant 0 : index
    %c0_13 = arith.constant 0 : index
    %26 = vector.load %arg5[%c0_12, %c0_13] : memref<1x32xf32, #tpu.memory_space<vmem>>, vector<1x32xf32>
    %27 = vector.broadcast %26 : vector<1x32xf32> to vector<8x32xf32>
    %28 = arith.mulf %25, %27 : vector<8x32xf32>
    %c0_14 = arith.constant 0 : index
    %c0_15 = arith.constant 0 : index
    %29 = vector.load %arg6[%c0_14, %c0_15] : memref<1x32xf32, #tpu.memory_space<vmem>>, vector<1x32xf32>
    %30 = vector.broadcast %29 : vector<1x32xf32> to vector<8x32xf32>
    %31 = arith.addf %28, %30 : vector<8x32xf32>
    %c0_16 = arith.constant 0 : index
    %c0_17 = arith.constant 0 : index
    %32 = vector.load %arg7[%c0_16, %c0_17] : memref<8x32xf32, #tpu.memory_space<vmem>>, vector<8x32xf32>
    tpu.vector_store %arg7[%c0_16, %c0_17], %31 {strides = array<i32>} : memref<8x32xf32, #tpu.memory_space<vmem>>, vector<8x32xf32>,
    return
  }
  func.func @transform_0(%arg0: i32) -> (i32, i32) {
    %c0_i32 = arith.constant 0 : i32
    %c0_i32_0 = arith.constant 0 : i32
    return %arg0, %c0_i32 : i32, i32
  }
  func.func @transform_1(%arg0: i32) -> (i32, i32) {
    %c0_i32 = arith.constant 0 : i32
    %c0_i32_0 = arith.constant 0 : i32
    %c0_i32_1 = arith.constant 0 : i32
    return %c0_i32, %c0_i32_0 : i32, i32
  }
  func.func @transform_2(%arg0: i32) -> (i32, i32) {
    %c0_i32 = arith.constant 0 : i32
    %c0_i32_0 = arith.constant 0 : i32
    %c0_i32_1 = arith.constant 0 : i32
    return %c0_i32, %c0_i32_0 : i32, i32
  }
  func.func @transform_3(%arg0: i32) -> (i32, i32) {
    %c0_i32 = arith.constant 0 : i32
    %c0_i32_0 = arith.constant 0 : i32
    return %arg0, %c0_i32 : i32, i32
  }
  func.func @transform_4(%arg0: i32) -> (i32, i32) {
    %c0_i32 = arith.constant 0 : i32
    %c0_i32_0 = arith.constant 0 : i32
    %c0_i32_1 = arith.constant 0 : i32
    return %c0_i32, %c0_i32_0 : i32, i32
  }
  func.func @transform_5(%arg0: i32) -> (i32, i32) {
    %c0_i32 = arith.constant 0 : i32
    %c0_i32_0 = arith.constant 0 : i32
    %c0_i32_1 = arith.constant 0 : i32
    return %c0_i32, %c0_i32_0 : i32, i32
  }
  func.func @transform_6(%arg0: i32) -> (i32, i32) {
    %c0_i32 = arith.constant 0 : i32
    %c0_i32_0 = arith.constant 0 : i32
    return %arg0, %c0_i32 : i32, i32
  }
}

</mosaic_0001>

<llo_original>
// kernel: tpu_custom_call.1
$region0: #{tpu_custom_call.1}
  #allocation0 [shape = 'u32[]', space=smem, size = 0x4, offset = 0x4, fixed_abs, tag = 'smem constant byte address 0x4 - core index']
  #allocation1 [shape = 'u32[144,128]{1,0:T(1,128)}', space=vmem, size = 0x12000, scoped, tag = 'internal scratch']
  %s0 = inlined_call_operand.hbm [shape: f32[16,32], index: 0, kind: input, shape index: {}]
  %s1 = inlined_call_operand.hbm [shape: f32[32,32], index: 1, kind: input, shape index: {}]
  %s2 = inlined_call_operand.vmem [shape: f32[1,32], index: 2, kind: input, shape index: {}]
  %s3 = inlined_call_operand.hbm [shape: f32[16,32], index: 3, kind: input, shape index: {}]
  %s4 = inlined_call_operand.vmem [shape: f32[1,32], index: 4, kind: input, shape index: {}]
  %s5 = inlined_call_operand.vmem [shape: f32[1,32], index: 5, kind: input, shape index: {}]
  %s6 = inlined_call_operand.hbm [shape: f32[16,32], index: 6, kind: output, shape index: {}]
  %s7 = sld [smem:[#allocation0]]
  $region69: #{tpu_custom_call.1} parent=0
    _
  %s9 = ssub.s32 1, %s7
  %s10 = scalar_select 0, %s9, %s7
  $region1: #{tpu_custom_call.1} parent=0
    #allocation2 [shape = 'u8[8192]{0}', space=vmem, size = 0x2000, scoped, tag = 'input window, operand 0']
    #allocation3 [shape = 's32[2]{0}', space=sflag, size = 0x8, scoped, tag = 'scoped memory for tpu_custom_call.1']
    #allocation4 [shape = 's32[2]{0}', space=sflag, size = 0x8, scoped, tag = 'scoped memory for tpu_custom_call.1']
    #allocation5 [shape = 'u8[16384]{0}', space=vmem, size = 0x4000, scoped, tag = 'input window, operand 1, single buffered']
    #allocation6 [shape = 's32[1]{0}', space=sflag, size = 0x4, scoped, tag = 'scoped memory for tpu_custom_call.1']
    #allocation7 [shape = 'u8[8192]{0}', space=vmem, size = 0x2000, scoped, tag = 'input window, operand 3']
    #allocation8 [shape = 'u8[8192]{0}', space=vmem, size = 0x2000, scoped, tag = 'output window, operand 0']
    %11 = vsyncpa [#allocation3], 0
    %s12 = scalar_lea.sflag [#allocation3], 1
    %13 = vsyncpa %s12, 0
    %14 = vsyncpa [#allocation6], 0
    %15 = vsyncpa [#allocation4], 0
    %s16 = scalar_lea.sflag [#allocation4], 1
    %17 = vsyncpa %s16, 0
    loop: start=0, step=1, limit=4
    $region2: #{tpu_custom_call.1} parent=1 // loop_pre_header
      _
    $region3: #{tpu_custom_call.1} parent=1 // loop_header
      %s19 = sphi 0, %s23
      %p20 = scmp.ge.s32.totalorder %s19, 4
      %s29 = sphi 0, %s31
      %s32 = sphi 0, %s29
      %s33 = sphi 0, %s32
      %s49 = sphi 0, %s33
      %s53 = sphi 0, %s53
      %s55 = sphi 0, %s53
      %s56 = sphi 0, %s55
      %s70 = sphi 0, %s56
      %s74 = sphi 0, %s74
      %s76 = sphi 0, %s74
      %s77 = sphi 0, %s76
      %s91 = sphi 0, %s77
      %s97 = sphi 0, %s99
      %s100 = sphi 0, %s97
      %s101 = sphi 0, %s100
      %s117 = sphi 0, %s101
      %s121 = sphi 0, %s121
      %s123 = sphi 0, %s121
      %s124 = sphi 0, %s123
      %s138 = sphi 0, %s124
      %s142 = sphi 0, %s142
      %s144 = sphi 0, %s142
      %s145 = sphi 0, %s144
      %s159 = sphi 0, %s145
      %s165 = sphi 0, %s167
      %s168 = sphi 0, %s165
      %s169 = sphi 0, %s168
      %s185 = sphi 0, %s169
    $region4: #{tpu_custom_call.1} parent=1 // loop_header_branch
      %22 = sbr.rel (%p20) target = $region8
    $region5: #{tpu_custom_call.1} parent=1 // loop_body
      %s24 = ssub.s32 %s19, 1
      %s25 = ssub.s32 %s19, 2
      %s26 = sadd.s32 %s19, 1
      %s27 = ssub.s32 %s19, %s26
      %p28 = scmp.eq.s32.totalorder %s27, 0
      %s30 = sadd.s32 %s29, 1
      %s31 = scalar_select %p28, %s29, %s30
      %p34 = pneg %p28
      %p35 = scmp.eq.s32.totalorder %s19, 1
      %p36 = por %p34, %p35
      %p37 = scmp.ne.s32.totalorder %s29, %s32
      %p38 = scmp.eq.s32.totalorder %s19, 0
      %p39 = por %p37, %p38
      %p40 = scmp.ne.s32.totalorder %s29, %s32
      %p41 = scmp.eq.s32.totalorder %s24, 1
      %p42 = por %p40, %p41
      %p43 = scmp.ne.s32.totalorder %s32, %s33
      %p44 = scmp.eq.s32.totalorder %s24, 0
      %p45 = por %p43, %p44
      %p46 = scmp.ne.s32.totalorder %s32, %s33
      %p47 = scmp.eq.s32.totalorder %s25, 1
      %p48 = por %p46, %p47
      %p50 = scmp.ne.s32.totalorder %s33, %s49
      %p51 = scmp.eq.s32.totalorder %s25, 0
      %p52 = por %p50, %p51
      %s54 = sadd.s32 %s53, 1
      %p57 = scmp.eq.s32.totalorder %s19, 1
      %p58 = scmp.ne.s32.totalorder %s53, %s55
      %p59 = scmp.eq.s32.totalorder %s19, 0
      %p60 = por %p58, %p59
      %p61 = scmp.ne.s32.totalorder %s53, %s55
      %p62 = scmp.eq.s32.totalorder %s24, 1
      %p63 = por %p61, %p62
      %p64 = scmp.ne.s32.totalorder %s55, %s56
      %p65 = scmp.eq.s32.totalorder %s24, 0
      %p66 = por %p64, %p65
      %p67 = scmp.ne.s32.totalorder %s55, %s56
      %p68 = scmp.eq.s32.totalorder %s25, 1
      %p69 = por %p67, %p68
      %p71 = scmp.ne.s32.totalorder %s56, %s70
      %p72 = scmp.eq.s32.totalorder %s25, 0
      %p73 = por %p71, %p72
      %s75 = sadd.s32 %s74, 1
      %p78 = scmp.eq.s32.totalorder %s19, 1
      %p79 = scmp.ne.s32.totalorder %s74, %s76
      %p80 = scmp.eq.s32.totalorder %s19, 0
      %p81 = por %p79, %p80
      %p82 = scmp.ne.s32.totalorder %s74, %s76
      %p83 = scmp.eq.s32.totalorder %s24, 1
      %p84 = por %p82, %p83
      %p85 = scmp.ne.s32.totalorder %s76, %s77
      %p86 = scmp.eq.s32.totalorder %s24, 0
      %p87 = por %p85, %p86
      %p88 = scmp.ne.s32.totalorder %s76, %s77
      %p89 = scmp.eq.s32.totalorder %s25, 1
      %p90 = por %p88, %p89
      %p92 = scmp.ne.s32.totalorder %s77, %s91
      %p93 = scmp.eq.s32.totalorder %s25, 0
      %p94 = por %p92, %p93
      %s95 = ssub.s32 %s19, %s26
      %p96 = scmp.eq.s32.totalorder %s95, 0
      %s98 = sadd.s32 %s97, 1
      %s99 = scalar_select %p96, %s97, %s98
      %p102 = pneg %p96
      %p103 = scmp.eq.s32.totalorder %s19, 1
      %p104 = por %p102, %p103
      %p105 = scmp.ne.s32.totalorder %s97, %s100
      %p106 = scmp.eq.s32.totalorder %s19, 0
      %p107 = por %p105, %p106
      %p108 = scmp.ne.s32.totalorder %s97, %s100
      %p109 = scmp.eq.s32.totalorder %s24, 1
      %p110 = por %p108, %p109
      %p111 = scmp.ne.s32.totalorder %s100, %s101
      %p112 = scmp.eq.s32.totalorder %s24, 0
      %p113 = por %p111, %p112
      %p114 = scmp.ne.s32.totalorder %s100, %s101
      %p115 = scmp.eq.s32.totalorder %s25, 1
      %p116 = por %p114, %p115
      %p118 = scmp.ne.s32.totalorder %s101, %s117
      %p119 = scmp.eq.s32.totalorder %s25, 0
      %p120 = por %p118, %p119
      %s122 = sadd.s32 %s121, 1
      %p125 = scmp.eq.s32.totalorder %s19, 1
      %p126 = scmp.ne.s32.totalorder %s121, %s123
      %p127 = scmp.eq.s32.totalorder %s19, 0
      %p128 = por %p126, %p127
      %p129 = scmp.ne.s32.totalorder %s121, %s123
      %p130 = scmp.eq.s32.totalorder %s24, 1
      %p131 = por %p129, %p130
      %p132 = scmp.ne.s32.totalorder %s123, %s124
      %p133 = scmp.eq.s32.totalorder %s24, 0
      %p134 = por %p132, %p133
      %p135 = scmp.ne.s32.totalorder %s123, %s124
      %p136 = scmp.eq.s32.totalorder %s25, 1
      %p137 = por %p135, %p136
      %p139 = scmp.ne.s32.totalorder %s124, %s138
      %p140 = scmp.eq.s32.totalorder %s25, 0
      %p141 = por %p139, %p140
      %s143 = sadd.s32 %s142, 1
      %p146 = scmp.eq.s32.totalorder %s19, 1
      %p147 = scmp.ne.s32.totalorder %s142, %s144
      %p148 = scmp.eq.s32.totalorder %s19, 0
      %p149 = por %p147, %p148
      %p150 = scmp.ne.s32.totalorder %s142, %s144
      %p151 = scmp.eq.s32.totalorder %s24, 1
      %p152 = por %p150, %p151
      %p153 = scmp.ne.s32.totalorder %s144, %s145
      %p154 = scmp.eq.s32.totalorder %s24, 0
      %p155 = por %p153, %p154
      %p156 = scmp.ne.s32.totalorder %s144, %s145
      %p157 = scmp.eq.s32.totalorder %s25, 1
      %p158 = por %p156, %p157
      %p160 = scmp.ne.s32.totalorder %s145, %s159
      %p161 = scmp.eq.s32.totalorder %s25, 0
      %p162 = por %p160, %p161
      %s163 = ssub.s32 %s19, %s26
      %p164 = scmp.eq.s32.totalorder %s163, 0
      %s166 = sadd.s32 %s165, 1
      %s167 = scalar_select %p164, %s165, %s166
      %p170 = pneg %p164
      %p171 = scmp.eq.s32.totalorder %s19, 1
      %p172 = por %p170, %p171
      %p173 = scmp.ne.s32.totalorder %s165, %s168
      %p174 = scmp.eq.s32.totalorder %s19, 0
      %p175 = por %p173, %p174
      %p176 = scmp.ne.s32.totalorder %s165, %s168
      %p177 = scmp.eq.s32.totalorder %s24, 1
      %p178 = por %p176, %p177
      %p179 = scmp.ne.s32.totalorder %s168, %s169
      %p180 = scmp.eq.s32.totalorder %s24, 0
      %p181 = por %p179, %p180
      %p182 = scmp.ne.s32.totalorder %s168, %s169
      %p183 = scmp.eq.s32.totalorder %s25, 1
      %p184 = por %p182, %p183
      %p186 = scmp.ne.s32.totalorder %s169, %s185
      %p187 = scmp.eq.s32.totalorder %s25, 0
      %p188 = por %p186, %p187
      %p189 = scmp.le.s32.totalorder 1, %s19
      %p190 = scmp.lt.s32.totalorder %s19, 3
      %p191 = pnand %p189, %p190
      %p192 = pneg %p191
      // Predicated region
      $region9: #{tpu_custom_call.1} parent=5 // pred_check
        _
      $region10: #{tpu_custom_call.1} parent=5 // pred_check_branch
        %194 = sbr.rel (%p191) target = $region12
      $region11: #{tpu_custom_call.1} parent=5 // pred_region
        %s195 = ssub.s32 %s19, 1
        // Predicated region
        $region13: #{tpu_custom_call.1} parent=11 // pred_check
          %p196 = pneg %p66
        $region14: #{tpu_custom_call.1} parent=11 // pred_check_branch
          %198 = sbr.rel (%p196) target = $region16
        $region15: #{tpu_custom_call.1} parent=11 // pred_region
          %s200 = ssub.s32 512, 512
          %201 = vsyncadd [#allocation6], %s200
          %s202 = sshll.u32 [#allocation5], 4
          %s203 = int_to_ptr.vmem [resolvable:$true] %s202
          %208 = dma.hbm_to_vmem [thread:$0]  %s1, 512, %s203, [#allocation6], 128, 128, 8
        $region16: #{tpu_custom_call.1} parent=11 // pred_fallthru
          _
        // Predicated region
        $region17: #{tpu_custom_call.1} parent=11 // pred_check
          %p209 = pneg %p87
        $region18: #{tpu_custom_call.1} parent=11 // pred_check_branch
          %211 = sbr.rel (%p209) target = $region20
        $region19: #{tpu_custom_call.1} parent=11 // pred_region
          _
        $region20: #{tpu_custom_call.1} parent=11 // pred_fallthru
          _
        // Predicated region
        $region21: #{tpu_custom_call.1} parent=11 // pred_check
          %p212 = pneg %p134
        $region22: #{tpu_custom_call.1} parent=11 // pred_check_branch
          %214 = sbr.rel (%p212) target = $region24
        $region23: #{tpu_custom_call.1} parent=11 // pred_region
          _
        $region24: #{tpu_custom_call.1} parent=11 // pred_fallthru
          _
        // Predicated region
        $region25: #{tpu_custom_call.1} parent=11 // pred_check
          %p215 = pneg %p155
        $region26: #{tpu_custom_call.1} parent=11 // pred_check_branch
          %217 = sbr.rel (%p215) target = $region28
        $region27: #{tpu_custom_call.1} parent=11 // pred_region
          _
        $region28: #{tpu_custom_call.1} parent=11 // pred_fallthru
          _
      $region12: #{tpu_custom_call.1} parent=5 // pred_fallthru
        _
      %p218 = scmp.lt.s32.totalorder %s19, 2
      // Predicated region
      $region29: #{tpu_custom_call.1} parent=5 // pred_check
        %p219 = pneg %p218
      $region30: #{tpu_custom_call.1} parent=5 // pred_check_branch
        %221 = sbr.rel (%p219) target = $region32
      $region31: #{tpu_custom_call.1} parent=5 // pred_region
        // Predicated region
        $region33: #{tpu_custom_call.1} parent=31 // pred_check
          %p222 = pneg %p39
        $region34: #{tpu_custom_call.1} parent=31 // pred_check_branch
          %224 = sbr.rel (%p222) target = $region36
        $region35: #{tpu_custom_call.1} parent=31 // pred_region
          %s225 = sand.u32 %s19, 1
          %s226 = scalar_lea.sflag [#allocation3], %s225
          %s227 = sand.u32 %s29, 1
          %s228 = smul.addr %s227, 8
          %s229 = scalar_lea.vmem [#allocation2], %s228
          %s231 = ssub.s32 128, 128
          %232 = vsyncadd %s226, %s231
          %s233 = smul.addr %s19, 128
          %s234 = scalar_lea.hbm %s0, %s233
          %s236 = sshll.u32 %s229, 4
          %s237 = int_to_ptr.vmem [resolvable:$true] %s236
          %239 = dma.hbm_to_vmem [thread:$0]  %s234, 128, %s237, %s226
        $region36: #{tpu_custom_call.1} parent=31 // pred_fallthru
          _
        // Predicated region
        $region37: #{tpu_custom_call.1} parent=31 // pred_check
          %p240 = pneg %p107
        $region38: #{tpu_custom_call.1} parent=31 // pred_check_branch
          %242 = sbr.rel (%p240) target = $region40
        $region39: #{tpu_custom_call.1} parent=31 // pred_region
          %s243 = sand.u32 %s19, 1
          %s244 = scalar_lea.sflag [#allocation3], %s243
          %s245 = sand.u32 %s97, 1
          %s246 = smul.addr %s245, 8
          %s247 = scalar_lea.vmem [#allocation7], %s246
          %s249 = ssub.s32 128, 128
          %250 = vsyncadd %s244, %s249
          %s251 = smul.addr %s19, 128
          %s252 = scalar_lea.hbm %s3, %s251
          %s254 = sshll.u32 %s247, 4
          %s255 = int_to_ptr.vmem [resolvable:$true] %s254
          %257 = dma.hbm_to_vmem [thread:$0]  %s252, 128, %s255, %s244
        $region40: #{tpu_custom_call.1} parent=31 // pred_fallthru
          _
      $region32: #{tpu_custom_call.1} parent=5 // pred_fallthru
        _
      %p258 = scmp.le.s32.totalorder 1, %s19
      %p259 = scmp.lt.s32.totalorder %s19, 3
      %p260 = pnand %p258, %p259
      %p261 = pneg %p260
      // Predicated region
      $region41: #{tpu_custom_call.1} parent=5 // pred_check
        _
      $region42: #{tpu_custom_call.1} parent=5 // pred_check_branch
        %263 = sbr.rel (%p260) target = $region44
      $region43: #{tpu_custom_call.1} parent=5 // pred_region
        %s264 = ssub.s32 %s19, 1
        %s265 = sand.u32 %s24, 1
        %s266 = scalar_lea.sflag [#allocation3], %s265
        %s267 = sand.u32 %s32, 1
        %s268 = smul.addr %s267, 8
        %s269 = scalar_lea.vmem [#allocation2], %s268
        // Predicated region
        $region45: #{tpu_custom_call.1} parent=43 // pred_check
          %p270 = pneg %p45
        $region46: #{tpu_custom_call.1} parent=43 // pred_check_branch
          %272 = sbr.rel (%p270) target = $region48
        $region47: #{tpu_custom_call.1} parent=43 // pred_region
          %273 = dma.done %s266, 128
        $region48: #{tpu_custom_call.1} parent=43 // pred_fallthru
          _
        // Predicated region
        $region49: #{tpu_custom_call.1} parent=43 // pred_check
          %p274 = pneg %p66
        $region50: #{tpu_custom_call.1} parent=43 // pred_check_branch
          %276 = sbr.rel (%p274) target = $region52
        $region51: #{tpu_custom_call.1} parent=43 // pred_region
          %277 = dma.done [#allocation6], 512
        $region52: #{tpu_custom_call.1} parent=43 // pred_fallthru
          _
        %s278 = sand.u32 %s24, 1
        %s279 = scalar_lea.sflag [#allocation3], %s278
        %s280 = sand.u32 %s100, 1
        %s281 = smul.addr %s280, 8
        %s282 = scalar_lea.vmem [#allocation7], %s281
        // Predicated region
        $region53: #{tpu_custom_call.1} parent=43 // pred_check
          %p283 = pneg %p113
        $region54: #{tpu_custom_call.1} parent=43 // pred_check_branch
          %285 = sbr.rel (%p283) target = $region56
        $region55: #{tpu_custom_call.1} parent=43 // pred_region
          %286 = dma.done %s279, 128
        $region56: #{tpu_custom_call.1} parent=43 // pred_fallthru
          _
        %s287 = sand.u32 %s24, 1
        %s288 = scalar_lea.sflag [#allocation3], %s287
        %s289 = sand.u32 %s32, 1
        %s290 = smul.addr %s289, 8
        %s291 = scalar_lea.vmem [#allocation2], %s290
        %p292 = pneg %p45
        %p293 = pneg %p42
        %p294 = pneg %p66
        %p295 = pneg %p63
        %p296 = pneg %p87
        %p297 = pneg %p84
        %s298 = sand.u32 %s24, 1
        %s299 = scalar_lea.sflag [#allocation3], %s298
        %s300 = sand.u32 %s100, 1
        %s301 = smul.addr %s300, 8
        %s302 = scalar_lea.vmem [#allocation7], %s301
        %p303 = pneg %p113
        %p304 = pneg %p110
        %p305 = pneg %p134
        %p306 = pneg %p131
        %p307 = pneg %p155
        %p308 = pneg %p152
        %p309 = pneg %p181
        %p310 = pneg %p178
        %s311 = sand.u32 %s168, 1
        %s312 = scalar_lea.sflag [#allocation4], %s311
        %s313 = sand.u32 %s168, 1
        %s314 = smul.addr %s313, 8
        %s315 = scalar_lea.vmem [#allocation8], %s314
        %v316 = vld [vmem:[%s269] sm:$0xff]
        %v317 = vld [vmem:[#allocation5] sm:$0xff]
        %v318 = vld [vmem:[#allocation5 + $0x8] sm:$0xff]
        %v319 = vld [vmem:[#allocation5 + $0x10] sm:$0xff]
        %v320 = vld [vmem:[#allocation5 + $0x18] sm:$0xff]
        %v321 = vld [vmem:[%s2] sm:$0x1]
        %v323 = vlaneseq
        %v324 = vshrl.u32 %v323, 7
        %v325 = vsub.s32 0, %v324
        %v326 = vrot.slane %v321, %v325
        %vm328 = vcmask 261120
        %v330 = vsel %vm328, %v316, 0
        %332 = vmatprep.subr.mxu0 0.0
        %333 = vmatpush1.msra.mxu0 %v317
        %334 = vmatprep.subr.mxu0 0.0
        %335 = vmatpush1.msra.mxu0 %v318
        %336 = vmatprep.subr.mxu0 0.0
        %337 = vmatpush1.msra.mxu0 %v319
        %338 = vmatprep.subr.mxu0 0.0
        %339 = vmatpush1.msra.mxu0 %v320
        %340 = vmatprep.subr.mxu0 0.0
        %341 = vmatpush1.msra.mxu0 0.0
        %342 = vmatprep.subr.mxu0 0.0
        %343 = vmatpush1.msra.mxu0 0.0
        %344 = vmatprep.subr.mxu0 0.0
        %345 = vmatpush1.msra.mxu0 0.0
        %346 = vmatprep.subr.mxu0 0.0
        %347 = vmatpush1.msra.mxu0 0.0
        %348 = vmatprep.subr.mxu0 0.0
        %349 = vmatpush1.msra.mxu0 0.0
        %350 = vmatprep.subr.mxu0 0.0
        %351 = vmatpush1.msra.mxu0 0.0
        %352 = vmatprep.subr.mxu0 0.0
        %353 = vmatpush1.msra.mxu0 0.0
        %354 = vmatprep.subr.mxu0 0.0
        %355 = vmatpush1.msra.mxu0 0.0
        %356 = vmatprep.subr.mxu0 0.0
        %357 = vmatpush1.msra.mxu0 0.0
        %358 = vmatprep.subr.mxu0 0.0
        %359 = vmatpush1.msra.mxu0 0.0
        %360 = vmatprep.subr.mxu0 0.0
        %361 = vmatpush1.msra.mxu0 0.0
        %362 = vmatprep.subr.mxu0 0.0
        %363 = vmatpush1.msra.mxu0 0.0
        %364 = vmatprep.subr.mxu0 0.0
        %365 = vmatpush1.msra.mxu0 0.0
        %366 = vmatprep.subr.mxu0 0.0
        %367 = vmatpush1.msra.mxu0 0.0
        %368 = vmatprep.subr.mxu0 0.0
        %369 = vmatpush1.msra.mxu0 0.0
        %370 = vmatprep.subr.mxu0 0.0
        %371 = vmatpush1.msra.mxu0 0.0
        %372 = vmatprep.subr.mxu0 0.0
        %373 = vmatpush1.msra.mxu0 0.0
        %374 = vmatprep.subr.mxu0 0.0
        %375 = vmatpush1.msra.mxu0 0.0
        %376 = vmatprep.subr.mxu0 0.0
        %377 = vmatpush1.msra.mxu0 0.0
        %378 = vmatprep.subr.mxu0 0.0
        %379 = vmatpush1.msra.mxu0 0.0
        %380 = vmatprep.subr.mxu0 0.0
        %381 = vmatpush1.msra.mxu0 0.0
        %382 = vmatprep.subr.mxu0 0.0
        %383 = vmatpush1.msra.mxu0 0.0
        %384 = vmatprep.subr.mxu0 0.0
        %385 = vmatpush1.msra.mxu0 0.0
        %386 = vmatprep.subr.mxu0 0.0
        %387 = vmatpush1.msra.mxu0 0.0
        %388 = vmatprep.subr.mxu0 0.0
        %389 = vmatpush1.msra.mxu0 0.0
        %390 = vmatprep.subr.mxu0 0.0
        %391 = vmatpush1.msra.mxu0 0.0
        %392 = vmatprep.subr.mxu0 0.0
        %393 = vmatpush1.msra.mxu0 0.0
        %394 = vmatprep.subr.mxu0 0.0
        %395 = vmatpush1.msra.mxu0 0.0
        %396 = vmatprep.mubr.f32.mxu0 0.0
        %397 = vmatmul.mubr.f32.gmra.mrb[0].mxu0 %v330
        %v398 = vpop.f32.mrb[0].mxu0
        %v399 = vadd.f32 %v326, %v398
        %v400 = vpop.f32.mrb[0].mxu0
        %401 = vdwg.mxu0
        %v402 = vld [vmem:[%s282] sm:$0xff]
        %v403 = vadd.f32 %v399, %v402
        %v404 = vsel %vm328, %v403, 0.0
        %405 = vadd.xlane.f32.xlu0 %v404
        %v406 = vpop.xlane.xlu0 %405
        %v407 = vmul.f32 %v406, 0.03125
        %v408 = vmul.f32 %v403, %v403
        %v409 = vsel %vm328, %v408, 0.0
        %410 = vadd.xlane.f32.xlu0 %v409
        %v411 = vpop.xlane.xlu0 %410
        %v412 = vmul.f32 %v411, 0.03125
        %v413 = vmul.f32 %v407, %v407
        %v414 = vsub.f32 %v412, %v413
        %v415 = vadd.f32 %v414, 1e-05
        %v416 = vrsqrt.pop %v415
        %v417 = vsub.f32 %v403, %v407
        %v418 = vmul.f32 %v417, %v416
        %v419 = vld [vmem:[%s4] sm:$0x1]
        %v421 = vlaneseq
        %v422 = vshrl.u32 %v421, 7
        %v423 = vsub.s32 0, %v422
        %v424 = vrot.slane %v419, %v423
        %v426 = vmul.f32 %v418, %v424
        %v427 = vld [vmem:[%s5] sm:$0x1]
        %v429 = vlaneseq
        %v430 = vshrl.u32 %v429, 7
        %v431 = vsub.s32 0, %v430
        %v432 = vrot.slane %v427, %v431
        %v434 = vadd.f32 %v426, %v432
        %435 = vst.msk [vmem:[%s315] sm:$0xff] %vm328, %v434
        %s436 = sand.u32 %s168, 1
        %s437 = scalar_lea.sflag [#allocation4], %s436
        %s438 = sand.u32 %s168, 1
        %s439 = smul.addr %s438, 8
        %s440 = scalar_lea.vmem [#allocation8], %s439
        // Predicated region
        $region57: #{tpu_custom_call.1} parent=43 // pred_check
          %p441 = pneg %p178
        $region58: #{tpu_custom_call.1} parent=43 // pred_check_branch
          %443 = sbr.rel (%p441) target = $region60
        $region59: #{tpu_custom_call.1} parent=43 // pred_region
          %s445 = ssub.s32 128, 128
          %446 = vsyncadd %s437, %s445
          %s447 = smul.addr %s24, 128
          %s448 = scalar_lea.hbm %s6, %s447
          %s450 = sshll.u32 %s440, 4
          %s451 = int_to_ptr.vmem [resolvable:$true] %s450
          %453 = dma.vmem_to_hbm [thread:$0]  %s451, 128, %s448, %s437
        $region60: #{tpu_custom_call.1} parent=43 // pred_fallthru
          _
      $region44: #{tpu_custom_call.1} parent=5 // pred_fallthru
        _
      %p454 = scmp.le.s32.totalorder 2, %s19
      // Predicated region
      $region61: #{tpu_custom_call.1} parent=5 // pred_check
        %p455 = pneg %p454
      $region62: #{tpu_custom_call.1} parent=5 // pred_check_branch
        %457 = sbr.rel (%p455) target = $region64
      $region63: #{tpu_custom_call.1} parent=5 // pred_region
        %s458 = ssub.s32 %s19, 2
        // Predicated region
        $region65: #{tpu_custom_call.1} parent=63 // pred_check
          %p459 = pneg %p184
        $region66: #{tpu_custom_call.1} parent=63 // pred_check_branch
          %461 = sbr.rel (%p459) target = $region68
        $region67: #{tpu_custom_call.1} parent=63 // pred_region
          %s462 = sand.u32 %s169, 1
          %s463 = scalar_lea.sflag [#allocation4], %s462
          %s464 = sand.u32 %s169, 1
          %s465 = smul.addr %s464, 8
          %s466 = scalar_lea.vmem [#allocation8], %s465
          %467 = dma.done %s463, 128
        $region68: #{tpu_custom_call.1} parent=63 // pred_fallthru
          _
      $region64: #{tpu_custom_call.1} parent=5 // pred_fallthru
        _
    $region6: #{tpu_custom_call.1} parent=1 // loop_footer
      %s23 = sadd.s32 1, %s19
    $region7: #{tpu_custom_call.1} parent=1 // loop_footer_branch
      %18 = sbr.rel target = $region3
    $region8: #{tpu_custom_call.1} parent=1 // loop_exit
      _
    %468 = vsyncpa [#allocation3], 1
    %s469 = scalar_lea.sflag [#allocation3], 1
    %470 = vsyncpa %s469, 1
    %471 = vsyncpa [#allocation6], 1
    %472 = vsyncpa [#allocation4], 1
    %s473 = scalar_lea.sflag [#allocation4], 1
    %474 = vsyncpa %s473, 1

</llo_original>
